<compile_context>
chip_gen: v7x
topology: tpu7x:2x2x1
jax: 0.10.0
libtpu: 0.0.40
codegen_flags: <defaults>
</compile_context>

<pallas_src>
import jax
import jax.numpy as jnp
from jax.experimental import pallas as pl
from jax.experimental.pallas import tpu as pltpu


# ---------------------------------------------------------------------------
# Kernels
# ---------------------------------------------------------------------------
def _ffn_kernel_fused(x_ref, w1t_ref, b1_ref, w2t_ref, b2_ref, o_ref):
    # Grid = (M_tiles,).  Weights fully resident (constant block index).
    # x_ref: (tm, E); w1t_ref: (E, H); b1_ref: (1, H); w2t_ref: (H, E); b2_ref: (1, E)
    h = jnp.dot(x_ref[...], w1t_ref[...], preferred_element_type=jnp.float32)
    h = h + b1_ref[...]
    h = h * jax.nn.sigmoid(h)                     # SiLU
    # Dropout(p=0.0) == identity.
    out = jnp.dot(h.astype(w2t_ref.dtype), w2t_ref[...],
                  preferred_element_type=jnp.float32) + b2_ref[...]
    o_ref[...] = out.astype(o_ref.dtype)


def _ffn_kernel_streamed(x_ref, w1t_ref, b1_ref, w2t_ref, b2_ref, o_ref, acc_ref):
    # Grid = (M_tiles, H_tiles); axis 1 (H) is the reduction for the second matmul.
    # x_ref:   (tm, E)
    # w1t_ref: (E, th)   b1_ref: (1, th)
    # w2t_ref: (th, E)   b2_ref: (1, E)
    # o_ref:   (tm, E)   acc_ref: (tm, E) f32 scratch
    k = pl.program_id(1)

    @pl.when(k == 0)
    def _init():
        acc_ref[...] = jnp.zeros_like(acc_ref)

    h = jnp.dot(x_ref[...], w1t_ref[...],
                preferred_element_type=jnp.float32) + b1_ref[...]
    h = h * jax.nn.sigmoid(h)                     # SiLU
    # Dropout(p=0.0) == identity.
    acc_ref[...] += jnp.dot(h.astype(w2t_ref.dtype), w2t_ref[...],
                            preferred_element_type=jnp.float32)

    @pl.when(k == pl.num_programs(1) - 1)
    def _finalize():
        o_ref[...] = (acc_ref[...] + b2_ref[...]).astype(o_ref.dtype)


# ---------------------------------------------------------------------------
# Wrapper
# ---------------------------------------------------------------------------
def _round_up(x, m):
    return ((x + m - 1) // m) * m


def _pick_hidden_tile(hidden_dim, requested):
    """Largest H tile <= requested that is a multiple of 128 and divides H; else full H."""
    if hidden_dim <= requested:
        return hidden_dim
    candidates = [t for t in range(128, requested + 1, 128) if hidden_dim % t == 0]
    return max(candidates) if candidates else hidden_dim


def _vmem_estimate(tm, th, E, H, isz, fused):
    """Rough double-buffered footprint in bytes (inputs/outputs x2 + scratch + live f32 temps)."""
    if fused:
        return (2 * tm * E * isz      # x tile
                + 2 * E * H * isz     # W1^T (resident, still 2 bufs allocated)
                + 2 * H * 4           # b1
                + 2 * H * E * isz     # W2^T
                + 2 * E * 4           # b2
                + 2 * tm * E * isz    # output tile
                + tm * H * 4          # h intermediate (f32)
                + tm * E * 4)         # out intermediate (f32)
    return (2 * tm * E * isz          # x tile
            + 2 * E * th * isz        # W1^T slice
            + 2 * th * 4              # b1 slice
            + 2 * th * E * isz        # W2^T slice
            + 2 * E * 4               # b2
            + 2 * tm * E * isz        # output tile
            + tm * th * 4             # h intermediate (f32)
            + tm * E * 4)             # accumulator scratch (f32)


def position_wise_feed_forward(x, w1, b1, w2, b2, *, tile_m=256, tile_h=1024,
                               compute_dtype=None):
    """FFN: SiLU(x @ W1^T + b1) @ W2^T + b2  (Dropout(p=0) == identity).

    x:  (B, S, E) activations.
    w1: (H, E), b1: (H,)  -- PyTorch nn.Linear(embed_dim, hidden_dim) layout.
    w2: (E, H), b2: (E,)  -- PyTorch nn.Linear(hidden_dim, embed_dim) layout.
    compute_dtype: optional MXU operand dtype (e.g. jnp.bfloat16); accumulation is f32.
    """
    B, S, E = x.shape
    H = w1.shape[0]
    M = B * S

    out_dtype = x.dtype
    op_dtype = compute_dtype if compute_dtype is not None else x.dtype
    isz = jnp.dtype(op_dtype).itemsize

    x2d = x.reshape(M, E).astype(op_dtype)
    w1t = w1.T.astype(op_dtype)                   # (E, H)
    w2t = w2.T.astype(op_dtype)                   # (H, E)
    b1r = b1.reshape(1, H).astype(jnp.float32)
    b2r = b2.reshape(1, E).astype(jnp.float32)

    # --- tile selection ------------------------------------------------------
    VMEM_CAP = 60 * 1024 * 1024                   # safe for v7x (64 MiB physical)
    tm = _round_up(min(tile_m, _round_up(M, 8)), 8)

    th = H if H <= tile_h else _pick_hidden_tile(H, tile_h)
    fused = (th == H)

    est = _vmem_estimate(tm, th, E, H, isz, fused)
    if fused and est > VMEM_CAP:
        th2 = _pick_hidden_tile(H, max(128, tile_h // 2))
        if th2 < H:
            th, fused = th2, False
            est = _vmem_estimate(tm, th, E, H, isz, fused)
    while est > VMEM_CAP and tm > 8:
        tm = max(8, _round_up(tm // 2, 8))
        est = _vmem_estimate(tm, th, E, H, isz, fused)

    M_pad = _round_up(M, tm)
    if M_pad != M:
        x2d = jnp.pad(x2d, ((0, M_pad - M), (0, 0)))

    vmem_limit = int(min(max(int(est * 1.25), 16 * 1024 * 1024), 64 * 1024 * 1024))

    cost = pl.CostEstimate(
        flops=4 * M_pad * E * H,                  # two matmuls, 2 flops/MAC
        transcendentals=M_pad * H,                # sigmoid in SiLU
        bytes_accessed=(M_pad * E * 2 + 2 * E * H) * isz + (H + E) * 4,
    )

    if fused:
        out2d = pl.pallas_call(
            _ffn_kernel_fused,
            out_shape=jax.ShapeDtypeStruct((M_pad, E), out_dtype),
            grid_spec=pltpu.PrefetchScalarGridSpec(
                num_scalar_prefetch=0,
                grid=(M_pad // tm,),
                in_specs=[
                    pl.BlockSpec((tm, E), lambda i: (i, 0)),  # x tile
                    pl.BlockSpec((E, H), lambda i: (0, 0)),   # W1^T (resident)
                    pl.BlockSpec((1, H), lambda i: (0, 0)),   # b1
                    pl.BlockSpec((H, E), lambda i: (0, 0)),   # W2^T (resident)
                    pl.BlockSpec((1, E), lambda i: (0, 0)),   # b2
                ],
                out_specs=pl.BlockSpec((tm, E), lambda i: (i, 0)),
            ),
            compiler_params=pltpu.CompilerParams(
                dimension_semantics=("parallel",),
                vmem_limit_bytes=vmem_limit,
            ),
            cost_estimate=cost,
        )(x2d, w1t, b1r, w2t, b2r)
    else:
        out2d = pl.pallas_call(
            _ffn_kernel_streamed,
            out_shape=jax.ShapeDtypeStruct((M_pad, E), out_dtype),
            grid_spec=pltpu.PrefetchScalarGridSpec(
                num_scalar_prefetch=0,
                grid=(M_pad // tm, H // th),
                in_specs=[
                    pl.BlockSpec((tm, E), lambda i, k: (i, 0)),   # x tile
                    pl.BlockSpec((E, th), lambda i, k: (0, k)),   # W1^T slice
                    pl.BlockSpec((1, th), lambda i, k: (0, k)),   # b1 slice
                    pl.BlockSpec((th, E), lambda i, k: (k, 0)),   # W2^T slice
                    pl.BlockSpec((1, E), lambda i, k: (0, 0)),    # b2
                ],
                out_specs=pl.BlockSpec((tm, E), lambda i, k: (i, 0)),
                scratch_shapes=[pltpu.VMEM((tm, E), jnp.float32)],
            ),
            compiler_params=pltpu.CompilerParams(
                dimension_semantics=("parallel", "arbitrary"),
                vmem_limit_bytes=vmem_limit,
            ),
            cost_estimate=cost,
        )(x2d, w1t, b1r, w2t, b2r)

    if M_pad != M:
        out2d = out2d[:M]
    return out2d.reshape(B, S, E)


# ---------------------------------------------------------------------------
# Reference + self-test
# ---------------------------------------------------------------------------
def _reference(x, w1, b1, w2, b2):
    h = jnp.einsum("bse,he->bsh", x, w1) + b1
    h = h * jax.nn.sigmoid(h)
    return jnp.einsum("bsh,eh->bse", h, w2) + b2


if __name__ == "__main__":
    # Small, lane-aligned shapes consistent with the module: (batch, seq, embed).
    B, S, E, H = 2, 8, 128, 256

    key = jax.random.PRNGKey(0)
    kx, k1, kb1, k2, kb2 = jax.random.split(key, 5)

    x = jax.random.normal(kx, (B, S, E), dtype=jnp.float32)

    # nn.Linear-style uniform(-1/sqrt(fan_in), +1/sqrt(fan_in)) init.
    bound1 = 1.0 / (E ** 0.5)
    w1 = jax.random.uniform(k1, (H, E), minval=-bound1, maxval=bound1, dtype=jnp.float32)
    b1 = jax.random.uniform(kb1, (H,), minval=-bound1, maxval=bound1, dtype=jnp.float32)
    bound2 = 1.0 / (H ** 0.5)
    w2 = jax.random.uniform(k2, (E, H), minval=-bound2, maxval=bound2, dtype=jnp.float32)
    b2 = jax.random.uniform(kb2, (E,), minval=-bound2, maxval=bound2, dtype=jnp.float32)

    ref = _reference(x, w1, b1, w2, b2)

    # Fused path (H fits in one tile at these sizes).
    out = position_wise_feed_forward(x, w1, b1, w2, b2)
    out = jax.block_until_ready(out)
    assert out.shape == (B, S, E)
    assert jnp.allclose(out, ref, atol=1e-5, rtol=1e-5), "mismatch vs reference (fused)"

    # Force the streamed/accumulator path (2 M tiles x 2 H tiles).
    out_tiled = position_wise_feed_forward(x, w1, b1, w2, b2, tile_m=8, tile_h=128)
    out_tiled = jax.block_until_ready(out_tiled)
    assert jnp.allclose(out_tiled, ref, atol=1e-5, rtol=1e-5), "mismatch vs reference (streamed)"

    # TODO(synk): dropout with p > 0 (training mode) would need pltpu.prng_* inside the
    # kernel; the module defaults to p=0.0 (identity), so it is omitted.

    print("KERNEL_OK")
</pallas_src>

<mosaic_0001>
module attributes {stable_mosaic.version = 11 : i64} {
  func.func @_ffn_kernel_fused(%arg0: i32, %arg1: memref<16x128xf32, #tpu.memory_space<vmem>>, %arg2: memref<128x256xf32, #tpu.memory_space<vmem>>, %arg3: memref<1x256xf32, #tpu.memory_space<vmem>>, %arg4: memref<256x128xf32, #tpu.memory_space<vmem>>, %arg5: memref<1x128xf32, #tpu.memory_space<vmem>>, %arg6: memref<16x128xf32, #tpu.memory_space<vmem>>) attributes {dimension_semantics = [#tpu.dimension_semantics<parallel>], iteration_bounds = array<i64: 1>, scalar_prefetch = 0 : i64, scratch_operands = 0 : i64, tpu.core_type = #tpu.core_type<tc>, window_params = [{transform_indices = @transform_0, window_bounds = array<i64: 16, 128>}, {pipeline_mode = #tpu.pipeline_mode<synchronous>, transform_indices = @transform_1, window_bounds = array<i64: 128, 256>}, {pipeline_mode = #tpu.pipeline_mode<synchronous>, transform_indices = @transform_2, window_bounds = array<i64: 1, 256>}, {pipeline_mode = #tpu.pipeline_mode<synchronous>, transform_indices = @transform_3, window_bounds = array<i64: 256, 128>}, {pipeline_mode = #tpu.pipeline_mode<synchronous>, transform_indices = @transform_4, window_bounds = array<i64: 1, 128>}, {transform_indices = @transform_5, window_bounds = array<i64: 16, 128>}]} {
    %c0 = arith.constant 0 : index
    %c0_0 = arith.constant 0 : index
    %0 = vector.load %arg1[%c0, %c0_0] : memref<16x128xf32, #tpu.memory_space<vmem>>, vector<16x128xf32>
    %c0_1 = arith.constant 0 : index
    %c0_2 = arith.constant 0 : index
    %1 = vector.load %arg2[%c0_1, %c0_2] : memref<128x256xf32, #tpu.memory_space<vmem>>, vector<128x256xf32>
    %cst = arith.constant dense<0.000000e+00> : vector<16x256xf32>
    %2 = tpu.matmul %0, %1, %cst {dimension_numbers = #tpu.dot_dimension_numbers<[1], [0], [0], [1], [0, 0, 1, 1], [], []>} : vector<16x128xf32>, vector<128x256xf32>, vector<16x256xf32> -> vector<16x256xf32>
    %c0_3 = arith.constant 0 : index
    %c0_4 = arith.constant 0 : index
    %3 = vector.load %arg3[%c0_3, %c0_4] : memref<1x256xf32, #tpu.memory_space<vmem>>, vector<1x256xf32>
    %4 = vector.broadcast %3 : vector<1x256xf32> to vector<16x256xf32>
    %5 = arith.addf %2, %4 : vector<16x256xf32>
    %6 = arith.negf %5 : vector<16x256xf32>
    %7 = math.exp %6 : vector<16x256xf32>
    %cst_5 = arith.constant 1.000000e+00 : f32
    %8 = vector.broadcast %cst_5 : f32 to vector<16x256xf32>
    %9 = arith.addf %8, %7 : vector<16x256xf32>
    %10 = arith.divf %8, %9 : vector<16x256xf32>
    %11 = arith.mulf %5, %10 : vector<16x256xf32>
    %c0_6 = arith.constant 0 : index
    %c0_7 = arith.constant 0 : index
    %12 = vector.load %arg4[%c0_6, %c0_7] : memref<256x128xf32, #tpu.memory_space<vmem>>, vector<256x128xf32>
    %cst_8 = arith.constant dense<0.000000e+00> : vector<16x128xf32>
    %13 = tpu.matmul %11, %12, %cst_8 {dimension_numbers = #tpu.dot_dimension_numbers<[1], [0], [0], [1], [0, 0, 1, 1], [], []>} : vector<16x256xf32>, vector<256x128xf32>, vector<16x128xf32> -> vector<16x128xf32>
    %c0_9 = arith.constant 0 : index
    %c0_10 = arith.constant 0 : index
    %14 = vector.load %arg5[%c0_9, %c0_10] : memref<1x128xf32, #tpu.memory_space<vmem>>, vector<1x128xf32>
    %15 = vector.broadcast %14 : vector<1x128xf32> to vector<16x128xf32>
    %16 = arith.addf %13, %15 : vector<16x128xf32>
    %c0_11 = arith.constant 0 : index
    %c0_12 = arith.constant 0 : index
    %17 = vector.load %arg6[%c0_11, %c0_12] : memref<16x128xf32, #tpu.memory_space<vmem>>, vector<16x128xf32>
    tpu.vector_store %arg6[%c0_11, %c0_12], %16 {strides = array<i32>} : memref<16x128xf32, #tpu.memory_space<vmem>>, vector<16x128xf32>,
    return
  }
  func.func @transform_0(%arg0: i32) -> (i32, i32) {
    %c0_i32 = arith.constant 0 : i32
    %c0_i32_0 = arith.constant 0 : i32
    return %arg0, %c0_i32 : i32, i32
  }
  func.func @transform_1(%arg0: i32) -> (i32, i32) {
    %c0_i32 = arith.constant 0 : i32
    %c0_i32_0 = arith.constant 0 : i32
    %c0_i32_1 = arith.constant 0 : i32
    return %c0_i32, %c0_i32_0 : i32, i32
  }
  func.func @transform_2(%arg0: i32) -> (i32, i32) {
    %c0_i32 = arith.constant 0 : i32
    %c0_i32_0 = arith.constant 0 : i32
    %c0_i32_1 = arith.constant 0 : i32
    return %c0_i32, %c0_i32_0 : i32, i32
  }
  func.func @transform_3(%arg0: i32) -> (i32, i32) {
    %c0_i32 = arith.constant 0 : i32
    %c0_i32_0 = arith.constant 0 : i32
    %c0_i32_1 = arith.constant 0 : i32
    return %c0_i32, %c0_i32_0 : i32, i32
  }
  func.func @transform_4(%arg0: i32) -> (i32, i32) {
    %c0_i32 = arith.constant 0 : i32
    %c0_i32_0 = arith.constant 0 : i32
    %c0_i32_1 = arith.constant 0 : i32
    return %c0_i32, %c0_i32_0 : i32, i32
  }
  func.func @transform_5(%arg0: i32) -> (i32, i32) {
    %c0_i32 = arith.constant 0 : i32
    %c0_i32_0 = arith.constant 0 : i32
    return %arg0, %c0_i32 : i32, i32
  }
}

</mosaic_0001>

<llo_original>
// kernel: tpu_custom_call.1
$region0: #{tpu_custom_call.1}
  #allocation0 [shape = 'u32[]', space=smem, size = 0x4, offset = 0x4, fixed_abs, tag = 'smem constant byte address 0x4 - core index']
  #allocation1 [shape = 'u32[144,128]{1,0:T(1,128)}', space=vmem, size = 0x12000, scoped, tag = 'internal scratch']
  %s0 = inlined_call_operand.hbm [shape: f32[16,128], index: 0, kind: input, shape index: {}]
  %s1 = inlined_call_operand.hbm [shape: f32[128,256], index: 1, kind: input, shape index: {}]
  %s2 = inlined_call_operand.vmem [shape: f32[1,256], index: 2, kind: input, shape index: {}]
  %s3 = inlined_call_operand.hbm [shape: f32[256,128], index: 3, kind: input, shape index: {}]
  %s4 = inlined_call_operand.vmem [shape: f32[1,128], index: 4, kind: input, shape index: {}]
  %s5 = inlined_call_operand.hbm [shape: f32[16,128], index: 5, kind: output, shape index: {}]
  %s6 = sld [smem:[#allocation0]]
  $region42: #{tpu_custom_call.1} parent=0
    _
  %s8 = ssub.s32 1, %s6
  %s9 = scalar_select 0, %s8, %s6
  $region1: #{tpu_custom_call.1} parent=0
    #allocation2 [shape = 'u8[8192]{0}', space=vmem, size = 0x2000, scoped, tag = 'input window, operand 0, single buffered']
    #allocation3 [shape = 's32[1]{0}', space=sflag, size = 0x4, scoped, tag = 'scoped memory for tpu_custom_call.1']
    #allocation4 [shape = 's32[1]{0}', space=sflag, size = 0x4, scoped, tag = 'scoped memory for tpu_custom_call.1']
    #allocation5 [shape = 'u8[131072]{0}', space=vmem, size = 0x20000, scoped, tag = 'input window, operand 1, single buffered']
    #allocation6 [shape = 's32[1]{0}', space=sflag, size = 0x4, scoped, tag = 'scoped memory for tpu_custom_call.1']
    #allocation7 [shape = 'u8[131072]{0}', space=vmem, size = 0x20000, scoped, tag = 'input window, operand 3, single buffered']
    #allocation8 [shape = 'u8[8192]{0}', space=vmem, size = 0x2000, scoped, tag = 'output window, operand 0, single buffered']
    %10 = vsyncpa [#allocation3], 0
    %11 = vsyncpa [#allocation6], 0
    %12 = vsyncpa [#allocation4], 0
    // Predicated region
    $region2: #{tpu_custom_call.1} parent=1 // pred_check
      _
    $region3: #{tpu_custom_call.1} parent=1 // pred_check_branch
      %14 = sbr.rel (0) target = $region5
    $region4: #{tpu_custom_call.1} parent=1 // pred_region
      %s16 = ssub.s32 256, 256
      %17 = vsyncadd [#allocation3], %s16
      %s18 = sshll.u32 [#allocation2], 4
      %s19 = int_to_ptr.vmem [resolvable:$true] %s18
      %24 = dma.hbm_to_vmem [thread:$0]  %s0, 256, %s19, [#allocation3], 128, 128, 8
    $region5: #{tpu_custom_call.1} parent=1 // pred_fallthru
      _
    // Predicated region
    $region6: #{tpu_custom_call.1} parent=1 // pred_check
      _
    $region7: #{tpu_custom_call.1} parent=1 // pred_check_branch
      %26 = sbr.rel (0) target = $region9
    $region8: #{tpu_custom_call.1} parent=1 // pred_region
      %s28 = ssub.s32 4096, 4096
      %29 = vsyncadd [#allocation6], %s28
      %s30 = sshll.u32 [#allocation5], 4
      %s31 = int_to_ptr.vmem [resolvable:$true] %s30
      %36 = dma.hbm_to_vmem [thread:$0]  %s1, 4096, %s31, [#allocation6], 256, 256, 16
    $region9: #{tpu_custom_call.1} parent=1 // pred_fallthru
      _
    // Predicated region
    $region10: #{tpu_custom_call.1} parent=1 // pred_check
      _
    $region11: #{tpu_custom_call.1} parent=1 // pred_check_branch
      %38 = sbr.rel (0) target = $region13
    $region12: #{tpu_custom_call.1} parent=1 // pred_region
      _
    $region13: #{tpu_custom_call.1} parent=1 // pred_fallthru
      _
    // Predicated region
    $region14: #{tpu_custom_call.1} parent=1 // pred_check
      _
    $region15: #{tpu_custom_call.1} parent=1 // pred_check_branch
      %40 = sbr.rel (0) target = $region17
    $region16: #{tpu_custom_call.1} parent=1 // pred_region
      %s42 = ssub.s32 4096, 4096
      %43 = vsyncadd [#allocation6], %s42
      %s44 = sshll.u32 [#allocation7], 4
      %s45 = int_to_ptr.vmem [resolvable:$true] %s44
      %50 = dma.hbm_to_vmem [thread:$0]  %s3, 4096, %s45, [#allocation6], 128, 128, 8
    $region17: #{tpu_custom_call.1} parent=1 // pred_fallthru
      _
    // Predicated region
    $region18: #{tpu_custom_call.1} parent=1 // pred_check
      _
    $region19: #{tpu_custom_call.1} parent=1 // pred_check_branch
      %52 = sbr.rel (0) target = $region21
    $region20: #{tpu_custom_call.1} parent=1 // pred_region
      _
    $region21: #{tpu_custom_call.1} parent=1 // pred_fallthru
      _
    // Predicated region
    $region22: #{tpu_custom_call.1} parent=1 // pred_check
      _
    $region23: #{tpu_custom_call.1} parent=1 // pred_check_branch
      %54 = sbr.rel (0) target = $region25
    $region24: #{tpu_custom_call.1} parent=1 // pred_region
      %55 = dma.done [#allocation3], 256
    $region25: #{tpu_custom_call.1} parent=1 // pred_fallthru
      _
    // Predicated region
    $region26: #{tpu_custom_call.1} parent=1 // pred_check
      _
    $region27: #{tpu_custom_call.1} parent=1 // pred_check_branch
      %57 = sbr.rel (0) target = $region29
    $region28: #{tpu_custom_call.1} parent=1 // pred_region
      %58 = dma.done [#allocation6], 4096
    $region29: #{tpu_custom_call.1} parent=1 // pred_fallthru
      _
    // Predicated region
    $region30: #{tpu_custom_call.1} parent=1 // pred_check
      _
    $region31: #{tpu_custom_call.1} parent=1 // pred_check_branch
      %60 = sbr.rel (0) target = $region33
    $region32: #{tpu_custom_call.1} parent=1 // pred_region
      %61 = dma.done [#allocation6], 4096
    $region33: #{tpu_custom_call.1} parent=1 // pred_fallthru
      _
    %v62 = vld [vmem:[#allocation2] sm:$0xff]
    %v63 = vld [vmem:[#allocation2 + $0x8] sm:$0xff]
    %v64 = vld [vmem:[#allocation5] sm:$0xff]
    %v65 = vld [vmem:[#allocation5 + $0x8] sm:$0xff]
    %v66 = vld [vmem:[#allocation5 + $0x10] sm:$0xff]
    %v67 = vld [vmem:[#allocation5 + $0x18] sm:$0xff]
    %v68 = vld [vmem:[#allocation5 + $0x20] sm:$0xff]
    %v69 = vld [vmem:[#allocation5 + $0x28] sm:$0xff]
    %v70 = vld [vmem:[#allocation5 + $0x30] sm:$0xff]
    %v71 = vld [vmem:[#allocation5 + $0x38] sm:$0xff]
    %v72 = vld [vmem:[#allocation5 + $0x40] sm:$0xff]
    %v73 = vld [vmem:[#allocation5 + $0x48] sm:$0xff]
    %v74 = vld [vmem:[#allocation5 + $0x50] sm:$0xff]
    %v75 = vld [vmem:[#allocation5 + $0x58] sm:$0xff]
    %v76 = vld [vmem:[#allocation5 + $0x60] sm:$0xff]
    %v77 = vld [vmem:[#allocation5 + $0x68] sm:$0xff]
    %v78 = vld [vmem:[#allocation5 + $0x70] sm:$0xff]
    %v79 = vld [vmem:[#allocation5 + $0x78] sm:$0xff]
    %v80 = vld [vmem:[#allocation5 + $0x80] sm:$0xff]
    %v81 = vld [vmem:[#allocation5 + $0x88] sm:$0xff]
    %v82 = vld [vmem:[#allocation5 + $0x90] sm:$0xff]
    %v83 = vld [vmem:[#allocation5 + $0x98] sm:$0xff]
    %v84 = vld [vmem:[#allocation5 + $0xa0] sm:$0xff]
    %v85 = vld [vmem:[#allocation5 + $0xa8] sm:$0xff]
    %v86 = vld [vmem:[#allocation5 + $0xb0] sm:$0xff]
    %v87 = vld [vmem:[#allocation5 + $0xb8] sm:$0xff]
    %v88 = vld [vmem:[#allocation5 + $0xc0] sm:$0xff]
    %v89 = vld [vmem:[#allocation5 + $0xc8] sm:$0xff]
    %v90 = vld [vmem:[#allocation5 + $0xd0] sm:$0xff]
    %v91 = vld [vmem:[#allocation5 + $0xd8] sm:$0xff]
    %v92 = vld [vmem:[#allocation5 + $0xe0] sm:$0xff]
    %v93 = vld [vmem:[#allocation5 + $0xe8] sm:$0xff]
    %v94 = vld [vmem:[#allocation5 + $0xf0] sm:$0xff]
    %v95 = vld [vmem:[#allocation5 + $0xf8] sm:$0xff]
    %v96 = vld [vmem:[%s2] sm:$0x3]
    %v98 = vlaneseq
    %v99 = vshrl.u32 %v98, 7
    %v100 = vsub.s32 0, %v99
    %v101 = vrot.slane %v96, %v100
    %v102 = vlaneseq
    %v103 = vshrl.u32 %v102, 7
    %v104 = vsub.s32 1, %v103
    %v105 = vrot.slane %v96, %v104
    %108 = vmatprep.subr.mxu0 %v65
    %109 = vmatpush1.msra.mxu0 %v64
    %110 = vmatprep.subr.mxu0 %v67
    %111 = vmatpush1.msra.mxu0 %v66
    %112 = vmatprep.subr.mxu0 %v69
    %113 = vmatpush1.msra.mxu0 %v68
    %114 = vmatprep.subr.mxu0 %v71
    %115 = vmatpush1.msra.mxu0 %v70
    %116 = vmatprep.subr.mxu0 %v73
    %117 = vmatpush1.msra.mxu0 %v72
    %118 = vmatprep.subr.mxu0 %v75
    %119 = vmatpush1.msra.mxu0 %v74
    %120 = vmatprep.subr.mxu0 %v77
    %121 = vmatpush1.msra.mxu0 %v76
    %122 = vmatprep.subr.mxu0 %v79
    %123 = vmatpush1.msra.mxu0 %v78
    %124 = vmatprep.subr.mxu0 %v81
    %125 = vmatpush1.msra.mxu0 %v80
    %126 = vmatprep.subr.mxu0 %v83
    %127 = vmatpush1.msra.mxu0 %v82
    %128 = vmatprep.subr.mxu0 %v85
    %129 = vmatpush1.msra.mxu0 %v84
    %130 = vmatprep.subr.mxu0 %v87
    %131 = vmatpush1.msra.mxu0 %v86
    %132 = vmatprep.subr.mxu0 %v89
    %133 = vmatpush1.msra.mxu0 %v88
    %134 = vmatprep.subr.mxu0 %v91
    %135 = vmatpush1.msra.mxu0 %v90
    %136 = vmatprep.subr.mxu0 %v93
    %137 = vmatpush1.msra.mxu0 %v92
    %138 = vmatprep.subr.mxu0 %v95
    %139 = vmatpush1.msra.mxu0 %v94
    %140 = vmatprep.subr.mxu0 0.0
    %141 = vmatpush1.msra.mxu0 0.0
    %142 = vmatprep.subr.mxu0 0.0
    %143 = vmatpush1.msra.mxu0 0.0
    %144 = vmatprep.subr.mxu0 0.0
    %145 = vmatpush1.msra.mxu0 0.0
    %146 = vmatprep.subr.mxu0 0.0
    %147 = vmatpush1.msra.mxu0 0.0
    %148 = vmatprep.subr.mxu0 0.0
    %149 = vmatpush1.msra.mxu0 0.0
    %150 = vmatprep.subr.mxu0 0.0
    %151 = vmatpush1.msra.mxu0 0.0
    %152 = vmatprep.subr.mxu0 0.0
    %153 = vmatpush1.msra.mxu0 0.0
    %154 = vmatprep.subr.mxu0 0.0
    %155 = vmatpush1.msra.mxu0 0.0
    %156 = vmatprep.subr.mxu0 0.0
    %157 = vmatpush1.msra.mxu0 0.0
    %158 = vmatprep.subr.mxu0 0.0
    %159 = vmatpush1.msra.mxu0 0.0
    %160 = vmatprep.subr.mxu0 0.0
    %161 = vmatpush1.msra.mxu0 0.0
    %162 = vmatprep.subr.mxu0 0.0
    %163 = vmatpush1.msra.mxu0 0.0
    %164 = vmatprep.subr.mxu0 0.0
    %165 = vmatpush1.msra.mxu0 0.0
    %166 = vmatprep.subr.mxu0 0.0
    %167 = vmatpush1.msra.mxu0 0.0
    %168 = vmatprep.subr.mxu0 0.0
    %169 = vmatpush1.msra.mxu0 0.0
    %170 = vmatprep.subr.mxu0 0.0
    %171 = vmatpush1.msra.mxu0 0.0
    %172 = vmatprep.mubr.f32.mxu0 0.0
    %173 = vmatmul.mubr.f32.gmra.mrb[0].mxu0 %v62
    %v174 = vpop.f32.mrb[0].mxu0
    %v175 = vadd.f32 %v101, %v174
    %v176 = vpop.f32.mrb[0].mxu0
    %v177 = vadd.f32 %v105, %v176
    %178 = vmatprep.mubr.f32.mxu0 0.0
    %179 = vmatmul.mubr.f32.gmra.mrb[0].mxu0 %v63
    %v180 = vpop.f32.mrb[0].mxu0
    %v181 = vadd.f32 %v101, %v180
    %v182 = vpop.f32.mrb[0].mxu0
    %v183 = vadd.f32 %v105, %v182
    %184 = vdwg.mxu0
    %v185 = vxor.u32 %v175, 2147483648
    %v186 = vxor.u32 %v177, 2147483648
    %v187 = vxor.u32 %v181, 2147483648
    %v188 = vxor.u32 %v183, 2147483648
    %v189 = vmul.f32 %v185, 1.442695
    %v190 = vpow.pop %v189
    %v191 = vmul.f32 %v186, 1.442695
    %v192 = vpow.pop %v191
    %v193 = vmul.f32 %v187, 1.442695
    %v194 = vpow.pop %v193
    %v195 = vmul.f32 %v188, 1.442695
    %v196 = vpow.pop %v195
    %v197 = vadd.f32 %v190, 1.0
    %v198 = vadd.f32 %v192, 1.0
    %v199 = vadd.f32 %v194, 1.0
    %v200 = vadd.f32 %v196, 1.0
    %v201 = vrcp.pop %v197
    %v202 = vmul.f32 1.0, %v201
    %v203 = vrcp.pop %v198
    %v204 = vmul.f32 1.0, %v203
    %v205 = vrcp.pop %v199
    %v206 = vmul.f32 1.0, %v205
    %v207 = vrcp.pop %v200
    %v208 = vmul.f32 1.0, %v207
    %v209 = vmul.f32 %v175, %v202
    %v210 = vmul.f32 %v177, %v204
    %v211 = vmul.f32 %v181, %v206
    %v212 = vmul.f32 %v183, %v208
    %v213 = vld [vmem:[#allocation7] sm:$0xff]
    %v214 = vld [vmem:[#allocation7 + $0x8] sm:$0xff]
    %v215 = vld [vmem:[#allocation7 + $0x10] sm:$0xff]
    %v216 = vld [vmem:[#allocation7 + $0x18] sm:$0xff]
    %v217 = vld [vmem:[#allocation7 + $0x20] sm:$0xff]
    %v218 = vld [vmem:[#allocation7 + $0x28] sm:$0xff]
    %v219 = vld [vmem:[#allocation7 + $0x30] sm:$0xff]
    %v220 = vld [vmem:[#allocation7 + $0x38] sm:$0xff]
    %v221 = vld [vmem:[#allocation7 + $0x40] sm:$0xff]
    %v222 = vld [vmem:[#allocation7 + $0x48] sm:$0xff]
    %v223 = vld [vmem:[#allocation7 + $0x50] sm:$0xff]
    %v224 = vld [vmem:[#allocation7 + $0x58] sm:$0xff]
    %v225 = vld [vmem:[#allocation7 + $0x60] sm:$0xff]
    %v226 = vld [vmem:[#allocation7 + $0x68] sm:$0xff]
    %v227 = vld [vmem:[#allocation7 + $0x70] sm:$0xff]
    %v228 = vld [vmem:[#allocation7 + $0x78] sm:$0xff]
    %v229 = vld [vmem:[#allocation7 + $0x80] sm:$0xff]
    %v230 = vld [vmem:[#allocation7 + $0x88] sm:$0xff]
    %v231 = vld [vmem:[#allocation7 + $0x90] sm:$0xff]
    %v232 = vld [vmem:[#allocation7 + $0x98] sm:$0xff]
    %v233 = vld [vmem:[#allocation7 + $0xa0] sm:$0xff]
    %v234 = vld [vmem:[#allocation7 + $0xa8] sm:$0xff]
    %v235 = vld [vmem:[#allocation7 + $0xb0] sm:$0xff]
    %v236 = vld [vmem:[#allocation7 + $0xb8] sm:$0xff]
    %v237 = vld [vmem:[#allocation7 + $0xc0] sm:$0xff]
    %v238 = vld [vmem:[#allocation7 + $0xc8] sm:$0xff]
    %v239 = vld [vmem:[#allocation7 + $0xd0] sm:$0xff]
    %v240 = vld [vmem:[#allocation7 + $0xd8] sm:$0xff]
    %v241 = vld [vmem:[#allocation7 + $0xe0] sm:$0xff]
    %v242 = vld [vmem:[#allocation7 + $0xe8] sm:$0xff]
    %v243 = vld [vmem:[#allocation7 + $0xf0] sm:$0xff]
    %v244 = vld [vmem:[#allocation7 + $0xf8] sm:$0xff]
    %v245 = vld [vmem:[%s4] sm:$0x1]
    %v247 = vlaneseq
    %v248 = vshrl.u32 %v247, 7
    %v249 = vsub.s32 0, %v248
    %v250 = vrot.slane %v245, %v249
    %252 = vmatprep.subr.mxu0 0.0
    %253 = vmatpush1.msra.mxu0 %v213
    %254 = vmatprep.subr.mxu0 0.0
    %255 = vmatpush1.msra.mxu0 %v214
    %256 = vmatprep.subr.mxu0 0.0
    %257 = vmatpush1.msra.mxu0 %v215
    %258 = vmatprep.subr.mxu0 0.0
    %259 = vmatpush1.msra.mxu0 %v216
    %260 = vmatprep.subr.mxu0 0.0
    %261 = vmatpush1.msra.mxu0 %v217
    %262 = vmatprep.subr.mxu0 0.0
    %263 = vmatpush1.msra.mxu0 %v218
    %264 = vmatprep.subr.mxu0 0.0
    %265 = vmatpush1.msra.mxu0 %v219
    %266 = vmatprep.subr.mxu0 0.0
    %267 = vmatpush1.msra.mxu0 %v220
    %268 = vmatprep.subr.mxu0 0.0
    %269 = vmatpush1.msra.mxu0 %v221
    %270 = vmatprep.subr.mxu0 0.0
    %271 = vmatpush1.msra.mxu0 %v222
    %272 = vmatprep.subr.mxu0 0.0
    %273 = vmatpush1.msra.mxu0 %v223
    %274 = vmatprep.subr.mxu0 0.0
    %275 = vmatpush1.msra.mxu0 %v224
    %276 = vmatprep.subr.mxu0 0.0
    %277 = vmatpush1.msra.mxu0 %v225
    %278 = vmatprep.subr.mxu0 0.0
    %279 = vmatpush1.msra.mxu0 %v226
    %280 = vmatprep.subr.mxu0 0.0
    %281 = vmatpush1.msra.mxu0 %v227
    %282 = vmatprep.subr.mxu0 0.0
    %283 = vmatpush1.msra.mxu0 %v228
    %284 = vmatprep.subr.mxu0 0.0
    %285 = vmatpush1.msra.mxu0 %v229
    %286 = vmatprep.subr.mxu0 0.0
    %287 = vmatpush1.msra.mxu0 %v230
    %288 = vmatprep.subr.mxu0 0.0
    %289 = vmatpush1.msra.mxu0 %v231
    %290 = vmatprep.subr.mxu0 0.0
    %291 = vmatpush1.msra.mxu0 %v232
    %292 = vmatprep.subr.mxu0 0.0
    %293 = vmatpush1.msra.mxu0 %v233
    %294 = vmatprep.subr.mxu0 0.0
    %295 = vmatpush1.msra.mxu0 %v234
    %296 = vmatprep.subr.mxu0 0.0
    %297 = vmatpush1.msra.mxu0 %v235
    %298 = vmatprep.subr.mxu0 0.0
    %299 = vmatpush1.msra.mxu0 %v236
    %300 = vmatprep.subr.mxu0 0.0
    %301 = vmatpush1.msra.mxu0 %v237
    %302 = vmatprep.subr.mxu0 0.0
    %303 = vmatpush1.msra.mxu0 %v238
    %304 = vmatprep.subr.mxu0 0.0
    %305 = vmatpush1.msra.mxu0 %v239
    %306 = vmatprep.subr.mxu0 0.0
    %307 = vmatpush1.msra.mxu0 %v240
    %308 = vmatprep.subr.mxu0 0.0
    %309 = vmatpush1.msra.mxu0 %v241
    %310 = vmatprep.subr.mxu0 0.0
    %311 = vmatpush1.msra.mxu0 %v242
    %312 = vmatprep.subr.mxu0 0.0
    %313 = vmatpush1.msra.mxu0 %v243
    %314 = vmatprep.subr.mxu0 0.0
    %315 = vmatpush1.msra.mxu0 %v244
    %316 = vmatprep.mubr.f32.mxu0 %v210
    %317 = vmatmul.mubr.f32.gmra.mrb[0].mxu0 %v209
    %v318 = vpop.f32.mrb[0].mxu0
    %v319 = vadd.f32 %v250, %v318
    %v320 = vpop.f32.mrb[0].mxu0
    %321 = vmatprep.mubr.f32.mxu0 %v212
    %322 = vmatmul.mubr.f32.gmra.mrb[0].mxu0 %v211
    %v323 = vpop.f32.mrb[0].mxu0
    %v324 = vadd.f32 %v250, %v323
    %v325 = vpop.f32.mrb[0].mxu0
    %326 = vdwg.mxu0
    %327 = vst [vmem:[#allocation8] sm:$0xff] %v319
    %328 = vst [vmem:[#allocation8 + $0x8] sm:$0xff] %v324
    // Predicated region
    $region34: #{tpu_custom_call.1} parent=1 // pred_check
      _
    $region35: #{tpu_custom_call.1} parent=1 // pred_check_branch
      %330 = sbr.rel (0) target = $region37
    $region36: #{tpu_custom_call.1} parent=1 // pred_region
      %s332 = ssub.s32 256, 256
      %333 = vsyncadd [#allocation4], %s332
      %s334 = sshll.u32 [#allocation8], 4
      %s335 = int_to_ptr.vmem [resolvable:$true] %s334
      %340 = dma.vmem_to_hbm [thread:$0]  %s335, 256, %s5, [#allocation4], 128, 128, 8
    $region37: #{tpu_custom_call.1} parent=1 // pred_fallthru
      _
    // Predicated region
    $region38: #{tpu_custom_call.1} parent=1 // pred_check
      _
    $region39: #{tpu_custom_call.1} parent=1 // pred_check_branch
      %342 = sbr.rel (0) target = $region41
    $region40: #{tpu_custom_call.1} parent=1 // pred_region
      %343 = dma.done [#allocation4], 256
    $region41: #{tpu_custom_call.1} parent=1 // pred_fallthru
      _
    %344 = vsyncpa [#allocation3], 1
    %345 = vsyncpa [#allocation6], 1
    %346 = vsyncpa [#allocation4], 1

</llo_original>
